<compile_context>
chip_gen: v5e
topology: v5e:2x2
jax: 0.10.0
libtpu: 0.0.40
codegen_flags: <defaults>
</compile_context>

<pallas_src>
import functools

import jax
import jax.numpy as jnp
from jax import lax
from jax.experimental import pallas as pl
from jax.experimental.pallas import tpu as pltpu


def _cutmix_kernel(mask_ref, bnd_ref, img_ref, out_ref, carry_ref):
    """One grid step over a (Bb, N) block of flattened images.

    mask_ref  : (1, N) int32, resident; 1 inside the CutMix box, 0 outside.
    bnd_ref   : (1, 1, N) resident per-core boundary image = rolled partner of
                this core's first image.
    img_ref   : (Bb, N) input block.
    out_ref   : (Bb, N) output block.
    carry_ref : (1, N) VMEM scratch; last image of the previous block.
    """
    j = pl.program_id(1)
    bb = img_ref.shape[0]

    # (Re)initialize the per-core carry at the start of each core's sequence.
    @pl.when(j == 0)
    def _():
        carry_ref[...] = bnd_ref[0]

    in_box = mask_ref[...] != 0                       # (1, N) bool, grid-invariant

    # batch[b, box] = batch[b - 1, box]; row 0's partner comes from the carry.
    out_ref[0:1, :] = jnp.where(in_box, carry_ref[...], img_ref[0:1, :])
    if bb > 1:
        out_ref[1:bb, :] = jnp.where(
            in_box, img_ref[0:bb - 1, :], img_ref[1:bb, :])

    # Carry the last image of this block for the next (sequential) grid step.
    carry_ref[...] = img_ref[bb - 1:bb, :]


def _sample_params(key, p, alpha, H, W):
    """Randomness (gate, lambda, box) in plain JAX; mirrors the torch module."""
    kp, kl, kx, ky = jax.random.split(key, 4)
    apply_it = jax.random.uniform(kp) < p                  # torch.rand(1) < p
    lam0 = jax.random.beta(kl, alpha, alpha)               # Beta(alpha, alpha)
    r_x = jax.random.randint(kx, (), 0, W)                 # torch.randint(W)
    r_y = jax.random.randint(ky, (), 0, H)                 # torch.randint(H)

    r = 0.5 * jnp.sqrt(1.0 - lam0)
    r_w_half = jnp.floor(r * W).astype(jnp.int32)          # int(r * W)
    r_h_half = jnp.floor(r * H).astype(jnp.int32)

    x1 = jnp.maximum(r_x - r_w_half, 0).astype(jnp.int32)
    y1 = jnp.maximum(r_y - r_h_half, 0).astype(jnp.int32)
    x2 = jnp.minimum(r_x + r_w_half, W).astype(jnp.int32)
    y2 = jnp.minimum(r_y + r_h_half, H).astype(jnp.int32)

    area = ((x2 - x1) * (y2 - y1)).astype(jnp.float32)
    lam = 1.0 - area / float(W * H)                        # lambda from clipped box
    return apply_it, y1, y2, x1, x2, lam


def _pick_block_batch(B, row_bytes, itemsize, target_bytes):
    """Images per grid step: ~target_bytes blocks, dtype-aware sublane multiple."""
    mult = {4: 8, 2: 16, 1: 32}.get(itemsize, 8)
    if B * row_bytes <= target_bytes:
        return B
    best = None
    for d in range(mult, B, mult):                  # largest legal divisor <= target
        if B % d == 0 and d * row_bytes <= target_bytes:
            best = d
    if best is not None:
        return best
    for d in range(mult, B, mult):                  # smallest legal divisor
        if B % d == 0:
            return d
    # TODO(synk): ragged last block (pl.cdiv grid + pl.when guard) instead of a
    # whole-batch fallback for batches with no layout-legal divisor.
    return B


def random_cutmix(key, batch, target, *, p=0.5, alpha=1.0,
                  block_target_bytes=4 << 20):
    """Functional equivalent of RandomCutmix.forward (num_classes = target.shape[1])."""
    if batch.ndim != 4:
        raise ValueError(f"Batch ndim should be 4. Got {batch.ndim}")
    if not jnp.issubdtype(batch.dtype, jnp.floating):
        raise TypeError(f"Batch dtype should be a float tensor. Got {batch.dtype}.")
    if alpha <= 0:
        raise ValueError("Alpha param can't be zero.")

    B, C, H, W = batch.shape
    N = C * H * W
    itemsize = batch.dtype.itemsize
    row_bytes = N * itemsize

    apply_it, y1, y2, x1, x2, lam = _sample_params(key, p, alpha, H, W)

    Bb = _pick_block_batch(B, row_bytes, itemsize, block_target_bytes)
    G = B // Bb
    # 2-way batch split along a "parallel" grid axis -> both v7x TensorCores;
    # harmless (sequential) on 1-TC chips.
    P = 2 if (G >= 2 and G % 2 == 0) else 1
    Gp = G // P
    chunk = Gp * Bb

    block_bytes = Bb * row_bytes
    vmem_need = 4 * block_bytes + 3 * row_bytes + 4 * N
    vmem_limit_bytes = int(min(max(2 * vmem_need, 16 << 20), 32 << 20))

    def _cutmix(args):
        batch_in, target_in = args
        flat = batch_in.reshape(B, N)                  # lane-dense layout

        # Grid-invariant in-box mask, built ONCE outside the kernel (hoists the
        # iota / int-div / mod / compare chain out of every grid step).
        f = jnp.arange(N, dtype=jnp.int32)
        ww = f % W
        hh = (f // W) % H
        in_box = (hh >= y1) & (hh < y2) & (ww >= x1) & (ww < x2)
        mask = in_box.astype(jnp.int32).reshape(1, N)

        # Per-core boundary partner: the image just before each core's chunk
        # (image B-1 for core 0).  Shape (P, 1, N); resident, one row per core.
        bidx = jnp.array([(pp * chunk - 1) % B for pp in range(P)],
                         dtype=jnp.int32)
        boundary = flat[bidx].reshape(P, 1, N)

        out_flat = pl.pallas_call(
            _cutmix_kernel,
            out_shape=jax.ShapeDtypeStruct((B, N), batch_in.dtype),
            grid=(P, Gp),
            in_specs=[
                pl.BlockSpec((1, N), lambda p_, j: (0, 0)),        # mask (resident)
                pl.BlockSpec((1, 1, N), lambda p_, j: (p_, 0, 0)),  # boundary
                pl.BlockSpec((Bb, N), lambda p_, j: (p_ * Gp + j, 0)),
            ],
            out_specs=pl.BlockSpec((Bb, N), lambda p_, j: (p_ * Gp + j, 0)),
            scratch_shapes=[pltpu.VMEM((1, N), batch_in.dtype)],
            compiler_params=pltpu.CompilerParams(
                dimension_semantics=("parallel", "arbitrary"),
                vmem_limit_bytes=vmem_limit_bytes),
        )(mask, boundary, flat)

        out_batch = out_flat.reshape(B, C, H, W)
        # Tiny (B, K) label lerp stays in plain JAX.
        out_target = lam * target_in + (1.0 - lam) * jnp.roll(target_in, 1, axis=0)
        return out_batch, out_target.astype(target_in.dtype)

    def _identity(args):
        return args

    # With probability 1 - p the kernel is skipped entirely (no HBM streaming).
    return lax.cond(apply_it, _cutmix, _identity, (batch, target))


if __name__ == "__main__":
    def _reference(key, batch, target, p, alpha):
        Br, Cr, Hr, Wr = batch.shape
        apply_it, y1, y2, x1, x2, lam = _sample_params(key, p, alpha, Hr, Wr)
        hh = jnp.arange(Hr)[:, None]
        ww = jnp.arange(Wr)[None, :]
        box = (hh >= y1) & (hh < y2) & (ww >= x1) & (ww < x2)
        rb = jnp.where(box[None, None], jnp.roll(batch, 1, axis=0), batch)
        rt = lam * target + (1.0 - lam) * jnp.roll(target, 1, axis=0)
        rb = jnp.where(apply_it, rb, batch)
        rt = jnp.where(apply_it, rt, target)
        return rb, rt

    num_classes = 8

    # --- Test 1: module-sized small input (single block, no batch split). ----
    B, C, H, W = 2, 4, 16, 16
    k_img, k_lbl, k_call = jax.random.split(jax.random.PRNGKey(0), 3)
    batch = jax.random.normal(k_img, (B, C, H, W), dtype=jnp.float32)
    labels = jax.random.randint(k_lbl, (B,), 0, num_classes)
    target = jax.nn.one_hot(labels, num_classes, dtype=jnp.float32)

    fn = jax.jit(functools.partial(random_cutmix, p=1.0, alpha=1.0))
    out_batch, out_target = fn(k_call, batch, target)
    jax.block_until_ready((out_batch, out_target))

    ref_batch, ref_target = _reference(k_call, batch, target, 1.0, 1.0)
    assert out_batch.shape == (B, C, H, W) and out_batch.dtype == jnp.float32
    assert out_target.shape == (B, num_classes) and out_target.dtype == jnp.float32
    assert jnp.allclose(out_batch, ref_batch)
    assert jnp.allclose(out_target, ref_target)

    # --- Test 2: multi-block + 2-way parallel split (carry / boundary path). --
    B2, C2, H2, W2 = 32, 1, 8, 16
    k_img2, k_lbl2, k_call2 = jax.random.split(jax.random.PRNGKey(1), 3)
    batch2 = jax.random.normal(k_img2, (B2, C2, H2, W2), dtype=jnp.float32)
    target2 = jax.nn.one_hot(
        jax.random.randint(k_lbl2, (B2,), 0, num_classes), num_classes,
        dtype=jnp.float32)

    fn2 = jax.jit(functools.partial(
        random_cutmix, p=1.0, alpha=1.0, block_target_bytes=4096))
    out_batch2, out_target2 = fn2(k_call2, batch2, target2)
    jax.block_until_ready((out_batch2, out_target2))

    ref_batch2, ref_target2 = _reference(k_call2, batch2, target2, 1.0, 1.0)
    assert jnp.allclose(out_batch2, ref_batch2)
    assert jnp.allclose(out_target2, ref_target2)

    print("KERNEL_OK")
</pallas_src>

<mosaic_0001>
module attributes {stable_mosaic.version = 11 : i64} {
  func.func @_cutmix_kernel(%arg0: i32, %arg1: i32, %arg2: memref<1x1024xi32, #tpu.memory_space<vmem>>, %arg3: memref<1x1x1024xf32, #tpu.memory_space<vmem>>, %arg4: memref<2x1024xf32, #tpu.memory_space<vmem>>, %arg5: memref<2x1024xf32, #tpu.memory_space<vmem>>, %arg6: memref<1x1024xf32, #tpu.memory_space<vmem>>) attributes {dimension_semantics = [#tpu.dimension_semantics<parallel>, #tpu.dimension_semantics<arbitrary>], iteration_bounds = array<i64: 1, 1>, scalar_prefetch = 0 : i64, scratch_operands = 1 : i64, tpu.core_type = #tpu.core_type<tc>, window_params = [{pipeline_mode = #tpu.pipeline_mode<synchronous>, transform_indices = @transform_0, window_bounds = array<i64: 1, 1024>}, {transform_indices = @transform_1, window_bounds = array<i64: 1, 1, 1024>}, {transform_indices = @transform_2, window_bounds = array<i64: 2, 1024>}, {transform_indices = @transform_3, window_bounds = array<i64: 2, 1024>}]} {
    %c0_i32 = arith.constant 0 : i32
    %0 = arith.cmpi eq, %arg1, %c0_i32 : i32
    %1 = arith.extui %0 : i1 to i32
    %c0_i32_0 = arith.constant 0 : i32
    %2 = arith.cmpi ne, %1, %c0_i32_0 : i32
    scf.if %2 {
      %c0_18 = arith.constant 0 : index
      %c0_19 = arith.constant 0 : index
      %c0_20 = arith.constant 0 : index
      %16 = vector.load %arg3[%c0_18, %c0_19, %c0_20] : memref<1x1x1024xf32, #tpu.memory_space<vmem>>, vector<1x1x1024xf32>
      %17 = vector.shape_cast %16 : vector<1x1x1024xf32> to vector<1x1024xf32>
      %c0_21 = arith.constant 0 : index
      %c0_22 = arith.constant 0 : index
      %18 = vector.load %arg6[%c0_21, %c0_22] : memref<1x1024xf32, #tpu.memory_space<vmem>>, vector<1x1024xf32>
      tpu.vector_store %arg6[%c0_21, %c0_22], %17 {strides = array<i32>} : memref<1x1024xf32, #tpu.memory_space<vmem>>, vector<1x1024xf32>,
    } else {
    }
    %c0 = arith.constant 0 : index
    %c0_1 = arith.constant 0 : index
    %3 = vector.load %arg2[%c0, %c0_1] : memref<1x1024xi32, #tpu.memory_space<vmem>>, vector<1x1024xi32>
    %c0_i32_2 = arith.constant 0 : i32
    %4 = vector.broadcast %c0_i32_2 : i32 to vector<1x1024xi32>
    %5 = arith.cmpi ne, %3, %4 : vector<1x1024xi32>
    %c0_3 = arith.constant 0 : index
    %c0_4 = arith.constant 0 : index
    %6 = vector.load %arg6[%c0_3, %c0_4] : memref<1x1024xf32, #tpu.memory_space<vmem>>, vector<1x1024xf32>
    %c0_5 = arith.constant 0 : index
    %c0_6 = arith.constant 0 : index
    %7 = vector.load %arg4[%c0_5, %c0_6] : memref<2x1024xf32, #tpu.memory_space<vmem>>, vector<1x1024xf32>
    %8 = arith.select %5, %6, %7 : vector<1x1024xi1>, vector<1x1024xf32>
    %c0_7 = arith.constant 0 : index
    %c0_8 = arith.constant 0 : index
    %9 = vector.load %arg5[%c0_7, %c0_8] : memref<2x1024xf32, #tpu.memory_space<vmem>>, vector<1x1024xf32>
    tpu.vector_store %arg5[%c0_7, %c0_8], %8 {strides = array<i32>} : memref<2x1024xf32, #tpu.memory_space<vmem>>, vector<1x1024xf32>,
    %c0_9 = arith.constant 0 : index
    %c0_10 = arith.constant 0 : index
    %10 = vector.load %arg4[%c0_9, %c0_10] : memref<2x1024xf32, #tpu.memory_space<vmem>>, vector<1x1024xf32>
    %c1 = arith.constant 1 : index
    %c0_11 = arith.constant 0 : index
    %11 = vector.load %arg4[%c1, %c0_11] : memref<2x1024xf32, #tpu.memory_space<vmem>>, vector<1x1024xf32>
    %12 = arith.select %5, %10, %11 : vector<1x1024xi1>, vector<1x1024xf32>
    %c1_12 = arith.constant 1 : index
    %c0_13 = arith.constant 0 : index
    %13 = vector.load %arg5[%c1_12, %c0_13] : memref<2x1024xf32, #tpu.memory_space<vmem>>, vector<1x1024xf32>
    tpu.vector_store %arg5[%c1_12, %c0_13], %12 {strides = array<i32>} : memref<2x1024xf32, #tpu.memory_space<vmem>>, vector<1x1024xf32>,
    %c1_14 = arith.constant 1 : index
    %c0_15 = arith.constant 0 : index
    %14 = vector.load %arg4[%c1_14, %c0_15] : memref<2x1024xf32, #tpu.memory_space<vmem>>, vector<1x1024xf32>
    %c0_16 = arith.constant 0 : index
    %c0_17 = arith.constant 0 : index
    %15 = vector.load %arg6[%c0_16, %c0_17] : memref<1x1024xf32, #tpu.memory_space<vmem>>, vector<1x1024xf32>
    tpu.vector_store %arg6[%c0_16, %c0_17], %14 {strides = array<i32>} : memref<1x1024xf32, #tpu.memory_space<vmem>>, vector<1x1024xf32>,
    return
  }
  func.func @transform_0(%arg0: i32, %arg1: i32) -> (i32, i32) {
    %c0_i32 = arith.constant 0 : i32
    %c0_i32_0 = arith.constant 0 : i32
    %c0_i32_1 = arith.constant 0 : i32
    return %c0_i32, %c0_i32_0 : i32, i32
  }
  func.func @transform_1(%arg0: i32, %arg1: i32) -> (i32, i32, i32) {
    %c0_i32 = arith.constant 0 : i32
    %c0_i32_0 = arith.constant 0 : i32
    %c0_i32_1 = arith.constant 0 : i32
    return %arg0, %c0_i32, %c0_i32_0 : i32, i32, i32
  }
  func.func @transform_2(%arg0: i32, %arg1: i32) -> (i32, i32) {
    %c1_i32 = arith.constant 1 : i32
    %0 = arith.muli %arg0, %c1_i32 : i32
    %1 = arith.addi %0, %arg1 : i32
    %c0_i32 = arith.constant 0 : i32
    %c0_i32_0 = arith.constant 0 : i32
    return %1, %c0_i32 : i32, i32
  }
  func.func @transform_3(%arg0: i32, %arg1: i32) -> (i32, i32) {
    %c1_i32 = arith.constant 1 : i32
    %0 = arith.muli %arg0, %c1_i32 : i32
    %1 = arith.addi %0, %arg1 : i32
    %c0_i32 = arith.constant 0 : i32
    %c0_i32_0 = arith.constant 0 : i32
    return %1, %c0_i32 : i32, i32
  }
}

</mosaic_0001>

<llo_original>
// kernel: branch_1_fun.1
$region0: #{branch_1_fun.1}
  #allocation0 [shape = 'u32[]', space=smem, size = 0x4, offset = 0x4, fixed_abs, tag = 'smem constant byte address 0x4 - core index']
  #allocation1 [shape = 'u32[72,128]{1,0:T(1,128)}', space=vmem, size = 0x9000, scoped, tag = 'internal scratch']
  #allocation2 [shape = 'f32[1,1024]{1,0:T(1,128)}', space=vmem, size = 0x1000, scoped, tag = 'scratch operand']
  %s0 = inlined_call_operand.vmem [shape: s32[1,1024], index: 0, kind: input, shape index: {}]
  %s1 = inlined_call_operand.vmem [shape: f32[1,1,1024], index: 1, kind: input, shape index: {}]
  %s2 = inlined_call_operand.vmem [shape: f32[2,1024], index: 2, kind: input, shape index: {}]
  %s3 = inlined_call_operand.vmem [shape: f32[2,1024], index: 3, kind: output, shape index: {}]
  %s4 = sld [smem:[#allocation0]]
  $region26: #{branch_1_fun.1} parent=0
    _
  %s6 = ssub.s32 1, %s4
  %s7 = scalar_select 0, %s6, %s4
  // Predicated region
  $region2: #{branch_1_fun.1} parent=0 // pred_check
    _
  $region3: #{branch_1_fun.1} parent=0 // pred_check_branch
    %9 = sbr.rel (0) target = $region5
  $region4: #{branch_1_fun.1} parent=0 // pred_region
    _
  $region5: #{branch_1_fun.1} parent=0 // pred_fallthru
    _
  // Predicated region
  $region6: #{branch_1_fun.1} parent=0 // pred_check
    _
  $region7: #{branch_1_fun.1} parent=0 // pred_check_branch
    %11 = sbr.rel (0) target = $region9
  $region8: #{branch_1_fun.1} parent=0 // pred_region
    _
  $region9: #{branch_1_fun.1} parent=0 // pred_fallthru
    _
  // Predicated region
  $region10: #{branch_1_fun.1} parent=0 // pred_check
    _
  $region11: #{branch_1_fun.1} parent=0 // pred_check_branch
    %13 = sbr.rel (0) target = $region13
  $region12: #{branch_1_fun.1} parent=0 // pred_region
    %s14 = sadd.s32 0, 0
    %p15 = scmp.lt.s32.totalorder %s14, 0
    %s16 = scalar_select %p15, %s14, 0
    %s17 = smul.addr %s16, 8
    %s18 = smul.addr %s17, 2
    %s19 = scalar_lea.vmem %s2, %s18
    %s20 = sadd.s32 0, 0
  $region13: #{branch_1_fun.1} parent=0 // pred_fallthru
    _
  %s21 = sadd.s32 0, 0
  %p22 = scmp.lt.s32.totalorder %s21, 0
  %s23 = scalar_select %p22, %s21, 0
  %s24 = smul.addr %s23, 8
  %s25 = smul.addr %s24, 2
  %s26 = scalar_lea.vmem %s2, %s25
  %s27 = sadd.s32 0, 0
  %p28 = scmp.lt.s32.totalorder %s27, 0
  %s29 = scalar_select %p28, %s27, 0
  %s30 = smul.addr %s29, 8
  %s31 = smul.addr %s30, 2
  %s32 = scalar_lea.vmem %s3, %s31
  %s33 = sadd.s32 0, 0
  %p34 = scmp.lt.s32.totalorder %s33, 0
  %s35 = scalar_select %p34, %s33, 0
  %s36 = smul.addr %s35, 8
  %s37 = smul.addr %s36, 2
  %s38 = scalar_lea.vmem %s2, %s37
  %s39 = sadd.s32 0, 0
  %s40 = sadd.s32 0, 0
  %p41 = scmp.lt.s32.totalorder %s40, 0
  %s42 = scalar_select %p41, %s40, 0
  %s43 = smul.addr %s42, 8
  %s44 = smul.addr %s43, 2
  %s45 = scalar_lea.vmem %s3, %s44
  %s46 = sadd.s32 0, 0
  %p47 = scmp.eq.s32.totalorder 0, 0
  // Predicated region
  $region14: #{branch_1_fun.1} parent=0 // pred_check
    %p48 = pneg %p47
  $region15: #{branch_1_fun.1} parent=0 // pred_check_branch
    %50 = sbr.rel (%p48) target = $region17
  $region16: #{branch_1_fun.1} parent=0 // pred_region
    %v51 = vld [vmem:[%s1] sm:$0xff]
    %52 = vst [vmem:[#allocation2] sm:$0xff] %v51
  $region17: #{branch_1_fun.1} parent=0 // pred_fallthru
    _
  %v53 = vld [vmem:[%s0] sm:$0xff]
  %vm54 = vcmp.ne.s32.totalorder %v53, 0
  %v55 = vld [vmem:[#allocation2] sm:$0xff]
  %v56 = vld [vmem:[%s38] ss:$2 sm:$0xff]
  %v57 = vsel %vm54, %v55, %v56
  %58 = vst [vmem:[%s45] ss:$2 sm:$0xff] %v57
  %v59 = vld [vmem:[%s38] ss:$2 sm:$0xff]
  %s60 = scalar_lea.vmem %s38, 1
  %v61 = vld [vmem:[%s60] ss:$2 sm:$0xff]
  %v62 = vsel %vm54, %v59, %v61
  %s63 = scalar_lea.vmem %s45, 1
  %64 = vst [vmem:[%s63] ss:$2 sm:$0xff] %v62
  %v65 = vld [vmem:[%s60] ss:$2 sm:$0xff]
  %66 = vst [vmem:[#allocation2] sm:$0xff] %v65
  %s67 = sadd.s32 0, 0
  %p68 = scmp.lt.s32.totalorder %s67, 0
  %s69 = scalar_select %p68, %s67, 0
  %s70 = smul.addr %s69, 8
  %s71 = smul.addr %s70, 2
  %s72 = scalar_lea.vmem %s3, %s71
  // Predicated region
  $region18: #{branch_1_fun.1} parent=0 // pred_check
    _
  $region19: #{branch_1_fun.1} parent=0 // pred_check_branch
    %74 = sbr.rel (0) target = $region21
  $region20: #{branch_1_fun.1} parent=0 // pred_region
    %s75 = sadd.s32 0, 0
  $region21: #{branch_1_fun.1} parent=0 // pred_fallthru
    _
  // Predicated region
  $region22: #{branch_1_fun.1} parent=0 // pred_check
    _
  $region23: #{branch_1_fun.1} parent=0 // pred_check_branch
    %77 = sbr.rel (0) target = $region25
  $region24: #{branch_1_fun.1} parent=0 // pred_region
    %s78 = sadd.s32 0, 0
    %p79 = scmp.lt.s32.totalorder %s78, 0
    %s80 = scalar_select %p79, %s78, 0
    %s81 = smul.addr %s80, 8
    %s82 = smul.addr %s81, 2
    %s83 = scalar_lea.vmem %s3, %s82
  $region25: #{branch_1_fun.1} parent=0 // pred_fallthru
    _

</llo_original>
